<compile_context>
chip_gen: v7x
topology: tpu7x:2x2x1
jax: 0.10.0
libtpu: 0.0.40
codegen_flags: <defaults>
</compile_context>

<pallas_src>
import jax
import jax.numpy as jnp
from jax.experimental import pallas as pl
from jax.experimental.pallas import tpu as pltpu


def _round_up(x, m):
    return ((x + m - 1) // m) * m


def _spmm_kernel(rows_ref, cols_ref, vals_ref, emb_ref, out_ref,
                 gath_ref, rsel_ref):
    k = pl.program_id(1)                     # item-tile (reduction) axis
    tk = emb_ref.shape[0]                    # item tile size
    nnz = cols_ref.shape[1]                  # padded nnz (lane axis)

    # Transposed, value-weighted column selector (TK, NNZ), lane-dense on NNZ.
    # Subtract the scalar tile offset from the small (1, NNZ) cols instead of
    # adding it to the (TK, NNZ) iota.
    col_rel = cols_ref[...] - k * tk                                  # (1, NNZ)
    t_iota = jax.lax.broadcasted_iota(jnp.int32, (tk, nnz), 0)        # (TK, NNZ)
    w_selT = jnp.where(t_iota == col_rel, vals_ref[...],
                       jnp.float32(0.0)).astype(emb_ref.dtype)

    # Weighted gather of this tile's embedding rows on the MXU:
    #   contrib[n, d] = sum_t w_selT[t, n] * emb[t, d]
    contrib = jax.lax.dot_general(
        w_selT, emb_ref[...],
        dimension_numbers=(((0,), (0,)), ((), ())),
        preferred_element_type=jnp.float32)

    @pl.when(k == 0)
    def _():
        # First item tile: write directly (no zero store + VPU add).
        gath_ref[...] = contrib
        # Pure 0/1 row-scatter matrix (num_ids, NNZ); duplicates sum.  Built
        # once per D slab so it overlaps later embedding-tile DMAs instead of
        # sitting on the serial epilogue.
        num_ids = out_ref.shape[0]
        r_iota = jax.lax.broadcasted_iota(jnp.int32, (num_ids, nnz), 0)
        rsel_ref[...] = (r_iota == rows_ref[...]).astype(rsel_ref.dtype)

    @pl.when(k > 0)
    def _():
        gath_ref[...] += contrib

    @pl.when(k == pl.num_programs(1) - 1)
    def _():
        # Scatter-add rows: out[r, :] = sum_n rsel[r, n] * gath[n, :]
        out_ref[...] = jax.lax.dot_general(
            rsel_ref[...], gath_ref[...],
            dimension_numbers=(((1,), (0,)), ((), ())),
            preferred_element_type=jnp.float32).astype(out_ref.dtype)


def weighted_sum_sess_embedding(row_idx, col_idx, data, num_ids, embeddings):
    """A (sparse [num_ids, ITEMS_NUM]) @ embeddings ([ITEMS_NUM, D])."""
    items_num, d = embeddings.shape
    nnz = row_idx.shape[0]

    # ---- lane/sublane-friendly padded sizes --------------------------------
    d_pad = _round_up(max(d, 128), 128)       # lane-dense feature axis
    nnz_pad = _round_up(max(nnz, 128), 128)   # lane-dense nnz axis
    ids_pad = _round_up(max(num_ids, 8), 8)   # sublane-aligned output rows

    # MXU-aligned item (reduction) tile; single grid step when the whole
    # (padded) table fits comfortably in VMEM.
    if items_num <= 256:
        item_tile = _round_up(items_num, 8)
    else:
        item_tile = 256
    items_pad = _round_up(items_num, item_tile)

    # Independent D slabs -> leading "parallel" grid axis (sharded across the
    # two TensorCores on v7x; harmless on v5e/v6e).
    d_block = 256 if (d_pad % 256 == 0) else 128
    n_d = d_pad // d_block
    n_k = items_pad // item_tile

    # ---- pad inputs (padded nnz entries have val=0 -> contribute nothing;
    #      padded item rows / feature cols are zero and never referenced) ----
    emb_p = embeddings
    if (items_pad, d_pad) != (items_num, d):
        emb_p = jnp.pad(emb_p, ((0, items_pad - items_num), (0, d_pad - d)))

    def _pad_nnz(x, fill):
        if nnz_pad == nnz:
            return x
        return jnp.pad(x, (0, nnz_pad - nnz), constant_values=fill)

    rows2d = _pad_nnz(row_idx.astype(jnp.int32), 0).reshape(1, nnz_pad)
    cols2d = _pad_nnz(col_idx.astype(jnp.int32), 0).reshape(1, nnz_pad)
    vals2d = _pad_nnz(data.astype(jnp.float32), 0.0).reshape(1, nnz_pad)

    # ---- explicit VMEM budget (v7x has 64 MiB / TC) -------------------------
    vmem_bytes = (
        nnz_pad * d_block * 4 +                                # gather acc
        ids_pad * nnz_pad * 4 +                                # 0/1 row scatter
        2 * item_tile * d_block * emb_p.dtype.itemsize +       # dbl-buf emb
        2 * ids_pad * d_block * 4 +                            # dbl-buf out
        3 * 2 * nnz_pad * 4)                                   # rows/cols/vals
    vmem_limit = int(min(max(2 * vmem_bytes, 32 * 1024 * 1024),
                         64 * 1024 * 1024))
    # TODO(synk): for very large NNZ, block the NNZ axis (fori_loop chunks of
    #             the selectors) so (TK,NNZ)/(num_ids,NNZ) never materialize whole.
    # TODO(synk): skip item tiles with no referenced columns via scalar-prefetch
    #             tile ids (needs a static non-empty-tile count; dynamic grid
    #             sizes are not expressible under jit).

    out = pl.pallas_call(
        _spmm_kernel,
        out_shape=jax.ShapeDtypeStruct((ids_pad, d_pad), jnp.float32),
        grid_spec=pltpu.PrefetchScalarGridSpec(
            num_scalar_prefetch=0,
            grid=(n_d, n_k),
            in_specs=[
                pl.BlockSpec((1, nnz_pad), lambda j, k: (0, 0)),          # rows
                pl.BlockSpec((1, nnz_pad), lambda j, k: (0, 0)),          # cols
                pl.BlockSpec((1, nnz_pad), lambda j, k: (0, 0)),          # vals
                pl.BlockSpec((item_tile, d_block), lambda j, k: (k, j)),  # emb
            ],
            out_specs=pl.BlockSpec((ids_pad, d_block), lambda j, k: (0, j)),
            scratch_shapes=[
                pltpu.VMEM((nnz_pad, d_block), jnp.float32),   # gather acc
                pltpu.VMEM((ids_pad, nnz_pad), jnp.float32),   # 0/1 row scatter
            ],
        ),
        compiler_params=pltpu.CompilerParams(
            dimension_semantics=("parallel", "arbitrary"),
            vmem_limit_bytes=vmem_limit),
    )(rows2d, cols2d, vals2d, emb_p)

    return out[:num_ids, :d]


if __name__ == "__main__":
    # Small synthetic problem consistent with the module's forward.
    ITEMS_NUM = 64    # dataset._ITEMS_NUM
    D = 32            # embedding dim
    NUM_IDS = 8       # sessions in the batch
    NNZ = 64          # nonzeros in the sparse session/item matrix

    key = jax.random.PRNGKey(0)
    k_row, k_col, k_val, k_emb = jax.random.split(key, 4)

    row_idx = jax.random.randint(k_row, (NNZ,), 0, NUM_IDS, dtype=jnp.int32)
    col_idx = jax.random.randint(k_col, (NNZ,), 0, ITEMS_NUM, dtype=jnp.int32)
    data = jax.random.uniform(k_val, (NNZ,), dtype=jnp.float32)
    # Deterministically initialized "item embeddings" parameter.
    embeddings = jax.random.normal(k_emb, (ITEMS_NUM, D), dtype=jnp.float32)

    out = weighted_sum_sess_embedding(row_idx, col_idx, data, NUM_IDS,
                                      embeddings)
    out = jax.block_until_ready(out)

    # Pure-JAX reference: scatter-add of weighted gathered embedding rows.
    ref = jnp.zeros((NUM_IDS, D), jnp.float32).at[row_idx].add(
        data[:, None] * embeddings[col_idx])

    assert out.shape == (NUM_IDS, D) and out.dtype == jnp.float32
    assert jnp.allclose(out, ref, atol=1e-4, rtol=1e-4)
    print("KERNEL_OK")
</pallas_src>

<mosaic_0001>
module attributes {stable_mosaic.version = 11 : i64} {
  func.func @_spmm_kernel(%arg0: i32, %arg1: i32, %arg2: memref<1x128xi32, #tpu.memory_space<vmem>>, %arg3: memref<1x128xi32, #tpu.memory_space<vmem>>, %arg4: memref<1x128xf32, #tpu.memory_space<vmem>>, %arg5: memref<64x128xf32, #tpu.memory_space<vmem>>, %arg6: memref<8x128xf32, #tpu.memory_space<vmem>>, %arg7: memref<128x128xf32, #tpu.memory_space<vmem>>, %arg8: memref<8x128xf32, #tpu.memory_space<vmem>>) attributes {dimension_semantics = [#tpu.dimension_semantics<parallel>, #tpu.dimension_semantics<arbitrary>], iteration_bounds = array<i64: 1, 1>, scalar_prefetch = 0 : i64, scratch_operands = 2 : i64, tpu.core_type = #tpu.core_type<tc>, window_params = [{pipeline_mode = #tpu.pipeline_mode<synchronous>, transform_indices = @transform_0, window_bounds = array<i64: 1, 128>}, {pipeline_mode = #tpu.pipeline_mode<synchronous>, transform_indices = @transform_1, window_bounds = array<i64: 1, 128>}, {pipeline_mode = #tpu.pipeline_mode<synchronous>, transform_indices = @transform_2, window_bounds = array<i64: 1, 128>}, {transform_indices = @transform_3, window_bounds = array<i64: 64, 128>}, {transform_indices = @transform_4, window_bounds = array<i64: 8, 128>}]} {
    %c0 = arith.constant 0 : index
    %c0_0 = arith.constant 0 : index
    %0 = vector.load %arg3[%c0, %c0_0] : memref<1x128xi32, #tpu.memory_space<vmem>>, vector<1x128xi32>
    %c64_i32 = arith.constant 64 : i32
    %1 = arith.muli %arg1, %c64_i32 : i32
    %2 = vector.broadcast %1 : i32 to vector<1x128xi32>
    %3 = arith.subi %0, %2 : vector<1x128xi32>
    %4 = tpu.iota {dimensions = array<i32: 0>} : vector<64x128xi32>
    %5 = vector.broadcast %3 : vector<1x128xi32> to vector<64x128xi32>
    %6 = arith.cmpi eq, %4, %5 : vector<64x128xi32>
    %c0_1 = arith.constant 0 : index
    %c0_2 = arith.constant 0 : index
    %7 = vector.load %arg4[%c0_1, %c0_2] : memref<1x128xf32, #tpu.memory_space<vmem>>, vector<1x128xf32>
    %cst = arith.constant 0.000000e+00 : f32
    %8 = vector.shape_cast %7 : vector<1x128xf32> to vector<1x128xf32>
    %9 = vector.broadcast %8 : vector<1x128xf32> to vector<64x128xf32>
    %10 = vector.broadcast %cst : f32 to vector<64x128xf32>
    %11 = arith.select %6, %9, %10 : vector<64x128xi1>, vector<64x128xf32>
    %c0_3 = arith.constant 0 : index
    %c0_4 = arith.constant 0 : index
    %12 = vector.load %arg5[%c0_3, %c0_4] : memref<64x128xf32, #tpu.memory_space<vmem>>, vector<64x128xf32>
    %cst_5 = arith.constant dense<0.000000e+00> : vector<128x128xf32>
    %13 = tpu.matmul %11, %12, %cst_5 {dimension_numbers = #tpu.dot_dimension_numbers<[0], [0], [1], [1], [0, 1, 1, 1], [], []>} : vector<64x128xf32>, vector<64x128xf32>, vector<128x128xf32> -> vector<128x128xf32>
    %c0_i32 = arith.constant 0 : i32
    %14 = arith.cmpi eq, %arg1, %c0_i32 : i32
    %15 = arith.extui %14 : i1 to i32
    %c0_i32_6 = arith.constant 0 : i32
    %16 = arith.cmpi ne, %15, %c0_i32_6 : i32
    scf.if %16 {
      %c0_11 = arith.constant 0 : index
      %c0_12 = arith.constant 0 : index
      %23 = vector.load %arg7[%c0_11, %c0_12] : memref<128x128xf32, #tpu.memory_space<vmem>>, vector<128x128xf32>
      tpu.vector_store %arg7[%c0_11, %c0_12], %13 {strides = array<i32>} : memref<128x128xf32, #tpu.memory_space<vmem>>, vector<128x128xf32>,
      %24 = tpu.iota {dimensions = array<i32: 0>} : vector<8x128xi32>
      %c0_13 = arith.constant 0 : index
      %c0_14 = arith.constant 0 : index
      %25 = vector.load %arg2[%c0_13, %c0_14] : memref<1x128xi32, #tpu.memory_space<vmem>>, vector<1x128xi32>
      %26 = vector.broadcast %25 : vector<1x128xi32> to vector<8x128xi32>
      %27 = arith.cmpi eq, %24, %26 : vector<8x128xi32>
      %28 = arith.extui %27 : vector<8x128xi1> to vector<8x128xi32>
      %29 = arith.sitofp %28 : vector<8x128xi32> to vector<8x128xf32>
      %c0_15 = arith.constant 0 : index
      %c0_16 = arith.constant 0 : index
      %30 = vector.load %arg8[%c0_15, %c0_16] : memref<8x128xf32, #tpu.memory_space<vmem>>, vector<8x128xf32>
      tpu.vector_store %arg8[%c0_15, %c0_16], %29 {strides = array<i32>} : memref<8x128xf32, #tpu.memory_space<vmem>>, vector<8x128xf32>,
    } else {
    }
    %c0_i32_7 = arith.constant 0 : i32
    %17 = arith.cmpi sgt, %arg1, %c0_i32_7 : i32
    %18 = arith.extui %17 : i1 to i32
    %c0_i32_8 = arith.constant 0 : i32
    %19 = arith.cmpi ne, %18, %c0_i32_8 : i32
    scf.if %19 {
      %c0_11 = arith.constant 0 : index
      %c0_12 = arith.constant 0 : index
      %23 = vector.load %arg7[%c0_11, %c0_12] : memref<128x128xf32, #tpu.memory_space<vmem>>, vector<128x128xf32>
      %24 = arith.addf %23, %13 : vector<128x128xf32>
      %c0_13 = arith.constant 0 : index
      %c0_14 = arith.constant 0 : index
      %25 = vector.load %arg7[%c0_13, %c0_14] : memref<128x128xf32, #tpu.memory_space<vmem>>, vector<128x128xf32>
      tpu.vector_store %arg7[%c0_13, %c0_14], %24 {strides = array<i32>} : memref<128x128xf32, #tpu.memory_space<vmem>>, vector<128x128xf32>,
    } else {
    }
    %c0_i32_9 = arith.constant 0 : i32
    %20 = arith.cmpi eq, %arg1, %c0_i32_9 : i32
    %21 = arith.extui %20 : i1 to i32
    %c0_i32_10 = arith.constant 0 : i32
    %22 = arith.cmpi ne, %21, %c0_i32_10 : i32
    scf.if %22 {
      %c0_11 = arith.constant 0 : index
      %c0_12 = arith.constant 0 : index
      %23 = vector.load %arg8[%c0_11, %c0_12] : memref<8x128xf32, #tpu.memory_space<vmem>>, vector<8x128xf32>
      %c0_13 = arith.constant 0 : index
      %c0_14 = arith.constant 0 : index
      %24 = vector.load %arg7[%c0_13, %c0_14] : memref<128x128xf32, #tpu.memory_space<vmem>>, vector<128x128xf32>
      %cst_15 = arith.constant dense<0.000000e+00> : vector<8x128xf32>
      %25 = tpu.matmul %23, %24, %cst_15 {dimension_numbers = #tpu.dot_dimension_numbers<[1], [0], [0], [1], [0, 0, 1, 1], [], []>} : vector<8x128xf32>, vector<128x128xf32>, vector<8x128xf32> -> vector<8x128xf32>
      %c0_16 = arith.constant 0 : index
      %c0_17 = arith.constant 0 : index
      %26 = vector.load %arg6[%c0_16, %c0_17] : memref<8x128xf32, #tpu.memory_space<vmem>>, vector<8x128xf32>
      tpu.vector_store %arg6[%c0_16, %c0_17], %25 {strides = array<i32>} : memref<8x128xf32, #tpu.memory_space<vmem>>, vector<8x128xf32>,
    } else {
    }
    return
  }
  func.func @transform_0(%arg0: i32, %arg1: i32) -> (i32, i32) {
    %c0_i32 = arith.constant 0 : i32
    %c0_i32_0 = arith.constant 0 : i32
    %c0_i32_1 = arith.constant 0 : i32
    return %c0_i32, %c0_i32_0 : i32, i32
  }
  func.func @transform_1(%arg0: i32, %arg1: i32) -> (i32, i32) {
    %c0_i32 = arith.constant 0 : i32
    %c0_i32_0 = arith.constant 0 : i32
    %c0_i32_1 = arith.constant 0 : i32
    return %c0_i32, %c0_i32_0 : i32, i32
  }
  func.func @transform_2(%arg0: i32, %arg1: i32) -> (i32, i32) {
    %c0_i32 = arith.constant 0 : i32
    %c0_i32_0 = arith.constant 0 : i32
    %c0_i32_1 = arith.constant 0 : i32
    return %c0_i32, %c0_i32_0 : i32, i32
  }
  func.func @transform_3(%arg0: i32, %arg1: i32) -> (i32, i32) {
    %c0_i32 = arith.constant 0 : i32
    return %arg1, %arg0 : i32, i32
  }
  func.func @transform_4(%arg0: i32, %arg1: i32) -> (i32, i32) {
    %c0_i32 = arith.constant 0 : i32
    %c0_i32_0 = arith.constant 0 : i32
    return %c0_i32, %arg0 : i32, i32
  }
}

</mosaic_0001>

<llo_original>
// kernel: tpu_custom_call.1
$region0: #{tpu_custom_call.1}
  #allocation0 [shape = 'u32[]', space=smem, size = 0x4, offset = 0x4, fixed_abs, tag = 'smem constant byte address 0x4 - core index']
  #allocation1 [shape = 'u32[144,128]{1,0:T(1,128)}', space=vmem, size = 0x12000, scoped, tag = 'internal scratch']
  #allocation2 [shape = 'f32[128,128]{1,0:T(8,128)}', space=vmem, size = 0x10000, scoped, tag = 'scratch operand']
  #allocation3 [shape = 'f32[8,128]{1,0:T(8,128)}', space=vmem, size = 0x1000, scoped, tag = 'scratch operand']
  %s0 = inlined_call_operand.hbm [shape: s32[1,128], index: 0, kind: input, shape index: {}]
  %s1 = inlined_call_operand.vmem [shape: s32[1,128], index: 1, kind: input, shape index: {}]
  %s2 = inlined_call_operand.vmem [shape: f32[1,128], index: 2, kind: input, shape index: {}]
  %s3 = inlined_call_operand.hbm [shape: f32[64,128], index: 3, kind: input, shape index: {}]
  %s4 = inlined_call_operand.hbm [shape: f32[8,128], index: 4, kind: output, shape index: {}]
  %s5 = sld [smem:[#allocation0]]
  $region46: #{tpu_custom_call.1} parent=0
    _
  %s7 = ssub.s32 1, %s5
  %s8 = scalar_select 0, %s7, %s5
  $region1: #{tpu_custom_call.1} parent=0
    #allocation4 [shape = 'u8[512]{0}', space=vmem, size = 0x400, scoped, tag = 'input window, operand 0, single buffered']
    #allocation5 [shape = 's32[1]{0}', space=sflag, size = 0x4, scoped, tag = 'scoped memory for tpu_custom_call.1']
    #allocation6 [shape = 's32[1]{0}', space=sflag, size = 0x4, scoped, tag = 'scoped memory for tpu_custom_call.1']
    #allocation7 [shape = 'u8[32768]{0}', space=vmem, size = 0x8000, scoped, tag = 'input window, operand 3, single buffered']
    #allocation8 [shape = 's32[1]{0}', space=sflag, size = 0x4, scoped, tag = 'scoped memory for tpu_custom_call.1']
    #allocation9 [shape = 'u8[4096]{0}', space=vmem, size = 0x1000, scoped, tag = 'output window, operand 0, single buffered']
    %9 = vsyncpa [#allocation5], 0
    %10 = vsyncpa [#allocation8], 0
    %11 = vsyncpa [#allocation6], 0
    // Predicated region
    $region2: #{tpu_custom_call.1} parent=1 // pred_check
      _
    $region3: #{tpu_custom_call.1} parent=1 // pred_check_branch
      %13 = sbr.rel (0) target = $region5
    $region4: #{tpu_custom_call.1} parent=1 // pred_region
      %s15 = ssub.s32 16, 16
      %16 = vsyncadd [#allocation5], %s15
      %s18 = sshll.u32 [#allocation4], 4
      %s19 = int_to_ptr.vmem [resolvable:$true] %s18
      %21 = dma.hbm_to_vmem [thread:$0]  %s0, 16, %s19, [#allocation5]
    $region5: #{tpu_custom_call.1} parent=1 // pred_fallthru
      _
    // Predicated region
    $region6: #{tpu_custom_call.1} parent=1 // pred_check
      _
    $region7: #{tpu_custom_call.1} parent=1 // pred_check_branch
      %23 = sbr.rel (0) target = $region9
    $region8: #{tpu_custom_call.1} parent=1 // pred_region
      _
    $region9: #{tpu_custom_call.1} parent=1 // pred_fallthru
      _
    // Predicated region
    $region10: #{tpu_custom_call.1} parent=1 // pred_check
      _
    $region11: #{tpu_custom_call.1} parent=1 // pred_check_branch
      %25 = sbr.rel (0) target = $region13
    $region12: #{tpu_custom_call.1} parent=1 // pred_region
      _
    $region13: #{tpu_custom_call.1} parent=1 // pred_fallthru
      _
    // Predicated region
    $region14: #{tpu_custom_call.1} parent=1 // pred_check
      _
    $region15: #{tpu_custom_call.1} parent=1 // pred_check_branch
      %27 = sbr.rel (0) target = $region17
    $region16: #{tpu_custom_call.1} parent=1 // pred_region
      %s29 = ssub.s32 1024, 1024
      %30 = vsyncadd [#allocation8], %s29
      %s31 = sshll.u32 [#allocation7], 4
      %s32 = int_to_ptr.vmem [resolvable:$true] %s31
      %37 = dma.hbm_to_vmem [thread:$0]  %s3, 1024, %s32, [#allocation8], 128, 128, 8
    $region17: #{tpu_custom_call.1} parent=1 // pred_fallthru
      _
    // Predicated region
    $region18: #{tpu_custom_call.1} parent=1 // pred_check
      _
    $region19: #{tpu_custom_call.1} parent=1 // pred_check_branch
      %39 = sbr.rel (0) target = $region21
    $region20: #{tpu_custom_call.1} parent=1 // pred_region
      %40 = dma.done [#allocation5], 16
    $region21: #{tpu_custom_call.1} parent=1 // pred_fallthru
      _
    // Predicated region
    $region22: #{tpu_custom_call.1} parent=1 // pred_check
      _
    $region23: #{tpu_custom_call.1} parent=1 // pred_check_branch
      %42 = sbr.rel (0) target = $region25
    $region24: #{tpu_custom_call.1} parent=1 // pred_region
      %43 = dma.done [#allocation8], 1024
    $region25: #{tpu_custom_call.1} parent=1 // pred_fallthru
      _
    %v44 = vld [vmem:[%s1] sm:$0x1]
    %s45 = smul.u32 0, 64
    %v46 = vstv %s45
    %v47 = vsub.s32 %v44, %v46
    %v48 = vlaneseq
    %v49 = vshrl.u32 %v48, 7
    %v50 = vadd.s32 %v49, 8
    %v51 = vadd.s32 %v49, 16
    %v52 = vadd.s32 %v49, 24
    %v53 = vadd.s32 %v49, 32
    %v54 = vadd.s32 %v49, 40
    %v55 = vadd.s32 %v49, 48
    %v56 = vadd.s32 %v49, 56
    %v57 = vlaneseq
    %v58 = vshrl.u32 %v57, 7
    %v59 = vsub.s32 0, %v58
    %v60 = vrot.slane %v47, %v59
    %vm61 = vcmp.eq.s32.totalorder %v49, %v60
    %vm62 = vcmp.eq.s32.totalorder %v50, %v60
    %vm63 = vcmp.eq.s32.totalorder %v51, %v60
    %vm64 = vcmp.eq.s32.totalorder %v52, %v60
    %vm65 = vcmp.eq.s32.totalorder %v53, %v60
    %vm66 = vcmp.eq.s32.totalorder %v54, %v60
    %vm67 = vcmp.eq.s32.totalorder %v55, %v60
    %vm68 = vcmp.eq.s32.totalorder %v56, %v60
    %v69 = vld [vmem:[%s2] sm:$0x1]
    %v71 = vlaneseq
    %v72 = vshrl.u32 %v71, 7
    %v73 = vsub.s32 0, %v72
    %v74 = vrot.slane %v69, %v73
    %v76 = vsel %vm61, %v74, 0.0
    %v77 = vsel %vm62, %v74, 0.0
    %v78 = vsel %vm63, %v74, 0.0
    %v79 = vsel %vm64, %v74, 0.0
    %v80 = vsel %vm65, %v74, 0.0
    %v81 = vsel %vm66, %v74, 0.0
    %v82 = vsel %vm67, %v74, 0.0
    %v83 = vsel %vm68, %v74, 0.0
    %v84 = vld [vmem:[#allocation7] sm:$0xff]
    %v85 = vld [vmem:[#allocation7 + $0x8] sm:$0xff]
    %v86 = vld [vmem:[#allocation7 + $0x10] sm:$0xff]
    %v87 = vld [vmem:[#allocation7 + $0x18] sm:$0xff]
    %v88 = vld [vmem:[#allocation7 + $0x20] sm:$0xff]
    %v89 = vld [vmem:[#allocation7 + $0x28] sm:$0xff]
    %v90 = vld [vmem:[#allocation7 + $0x30] sm:$0xff]
    %v91 = vld [vmem:[#allocation7 + $0x38] sm:$0xff]
    %92 = vxpose.xlu0.b32.start [1/16] %v76, 128
    %93 = vxpose.xlu0.b32.cont [2/16] %v77, 128
    %94 = vxpose.xlu0.b32.cont [3/16] %v78, 128
    %95 = vxpose.xlu0.b32.cont [4/16] %v79, 128
    %96 = vxpose.xlu0.b32.cont [5/16] %v80, 128
    %97 = vxpose.xlu0.b32.cont [6/16] %v81, 128
    %98 = vxpose.xlu0.b32.cont [7/16] %v82, 128
    %99 = vxpose.xlu0.b32.cont [8/16] %v83, 128
    %100 = vxpose.xlu0.b32.cont [9/16] 0.0, 128
    %101 = vxpose.xlu0.b32.cont [10/16] 0.0, 128
    %102 = vxpose.xlu0.b32.cont [11/16] 0.0, 128
    %103 = vxpose.xlu0.b32.cont [12/16] 0.0, 128
    %104 = vxpose.xlu0.b32.cont [13/16] 0.0, 128
    %105 = vxpose.xlu0.b32.cont [14/16] 0.0, 128
    %106 = vxpose.xlu0.b32.cont [15/16] 0.0, 128
    %107 = vxpose.xlu0.b32.end [16/16] 0.0, 128
    %v108 = vpop.trf.xlu0
    %v109 = vpop.trf.xlu0
    %v110 = vpop.trf.xlu0
    %v111 = vpop.trf.xlu0
    %v112 = vpop.trf.xlu0
    %v113 = vpop.trf.xlu0
    %v114 = vpop.trf.xlu0
    %v115 = vpop.trf.xlu0
    %v116 = vpop.trf.xlu0
    %v117 = vpop.trf.xlu0
    %v118 = vpop.trf.xlu0
    %v119 = vpop.trf.xlu0
    %v120 = vpop.trf.xlu0
    %v121 = vpop.trf.xlu0
    %v122 = vpop.trf.xlu0
    %v123 = vpop.trf.xlu0
    %vm124 = vcmask 523264
    %v126 = vsel %vm124, %v108, 0
    %v129 = vsel %vm124, %v109, 0
    %v132 = vsel %vm124, %v110, 0
    %v135 = vsel %vm124, %v111, 0
    %v138 = vsel %vm124, %v112, 0
    %v141 = vsel %vm124, %v113, 0
    %v144 = vsel %vm124, %v114, 0
    %v147 = vsel %vm124, %v115, 0
    %v150 = vsel %vm124, %v116, 0
    %v153 = vsel %vm124, %v117, 0
    %v156 = vsel %vm124, %v118, 0
    %v159 = vsel %vm124, %v119, 0
    %v162 = vsel %vm124, %v120, 0
    %v165 = vsel %vm124, %v121, 0
    %v168 = vsel %vm124, %v122, 0
    %v171 = vsel %vm124, %v123, 0
    %173 = vmatprep.subr.mxu0 0.0
    %174 = vmatpush1.msra.mxu0 %v84
    %175 = vmatprep.subr.mxu0 0.0
    %176 = vmatpush1.msra.mxu0 %v85
    %177 = vmatprep.subr.mxu0 0.0
    %178 = vmatpush1.msra.mxu0 %v86
    %179 = vmatprep.subr.mxu0 0.0
    %180 = vmatpush1.msra.mxu0 %v87
    %181 = vmatprep.subr.mxu0 0.0
    %182 = vmatpush1.msra.mxu0 %v88
    %183 = vmatprep.subr.mxu0 0.0
    %184 = vmatpush1.msra.mxu0 %v89
    %185 = vmatprep.subr.mxu0 0.0
    %186 = vmatpush1.msra.mxu0 %v90
    %187 = vmatprep.subr.mxu0 0.0
    %188 = vmatpush1.msra.mxu0 %v91
    %189 = vmatprep.subr.mxu0 0.0
    %190 = vmatpush1.msra.mxu0 0.0
    %191 = vmatprep.subr.mxu0 0.0
    %192 = vmatpush1.msra.mxu0 0.0
    %193 = vmatprep.subr.mxu0 0.0
    %194 = vmatpush1.msra.mxu0 0.0
    %195 = vmatprep.subr.mxu0 0.0
    %196 = vmatpush1.msra.mxu0 0.0
    %197 = vmatprep.subr.mxu0 0.0
    %198 = vmatpush1.msra.mxu0 0.0
    %199 = vmatprep.subr.mxu0 0.0
    %200 = vmatpush1.msra.mxu0 0.0
    %201 = vmatprep.subr.mxu0 0.0
    %202 = vmatpush1.msra.mxu0 0.0
    %203 = vmatprep.subr.mxu0 0.0
    %204 = vmatpush1.msra.mxu0 0.0
    %205 = vmatprep.subr.mxu0 0.0
    %206 = vmatpush1.msra.mxu0 0.0
    %207 = vmatprep.subr.mxu0 0.0
    %208 = vmatpush1.msra.mxu0 0.0
    %209 = vmatprep.subr.mxu0 0.0
    %210 = vmatpush1.msra.mxu0 0.0
    %211 = vmatprep.subr.mxu0 0.0
    %212 = vmatpush1.msra.mxu0 0.0
    %213 = vmatprep.subr.mxu0 0.0
    %214 = vmatpush1.msra.mxu0 0.0
    %215 = vmatprep.subr.mxu0 0.0
    %216 = vmatpush1.msra.mxu0 0.0
    %217 = vmatprep.subr.mxu0 0.0
    %218 = vmatpush1.msra.mxu0 0.0
    %219 = vmatprep.subr.mxu0 0.0
    %220 = vmatpush1.msra.mxu0 0.0
    %221 = vmatprep.subr.mxu0 0.0
    %222 = vmatpush1.msra.mxu0 0.0
    %223 = vmatprep.subr.mxu0 0.0
    %224 = vmatpush1.msra.mxu0 0.0
    %225 = vmatprep.subr.mxu0 0.0
    %226 = vmatpush1.msra.mxu0 0.0
    %227 = vmatprep.subr.mxu0 0.0
    %228 = vmatpush1.msra.mxu0 0.0
    %229 = vmatprep.subr.mxu0 0.0
    %230 = vmatpush1.msra.mxu0 0.0
    %231 = vmatprep.subr.mxu0 0.0
    %232 = vmatpush1.msra.mxu0 0.0
    %233 = vmatprep.subr.mxu0 0.0
    %234 = vmatpush1.msra.mxu0 0.0
    %235 = vmatprep.subr.mxu0 0.0
    %236 = vmatpush1.msra.mxu0 0.0
    %237 = vmatprep.mubr.f32.mxu0 0.0
    %238 = vmatmul.mubr.f32.gmra.mrb[0].mxu0 %v126
    %v239 = vpop.f32.mrb[0].mxu0
    %v240 = vadd.f32 0.0, %v239
    %v241 = vpop.f32.mrb[0].mxu0
    %242 = vmatprep.mubr.f32.mxu0 0.0
    %243 = vmatmul.mubr.f32.gmra.mrb[0].mxu0 %v129
    %v244 = vpop.f32.mrb[0].mxu0
    %v245 = vadd.f32 0.0, %v244
    %v246 = vpop.f32.mrb[0].mxu0
    %247 = vmatprep.mubr.f32.mxu0 0.0
    %248 = vmatmul.mubr.f32.gmra.mrb[0].mxu0 %v132
    %v249 = vpop.f32.mrb[0].mxu0
    %v250 = vadd.f32 0.0, %v249
    %v251 = vpop.f32.mrb[0].mxu0
    %252 = vmatprep.mubr.f32.mxu0 0.0
    %253 = vmatmul.mubr.f32.gmra.mrb[0].mxu0 %v135
    %v254 = vpop.f32.mrb[0].mxu0
    %v255 = vadd.f32 0.0, %v254
    %v256 = vpop.f32.mrb[0].mxu0
    %257 = vmatprep.mubr.f32.mxu0 0.0
    %258 = vmatmul.mubr.f32.gmra.mrb[0].mxu0 %v138
    %v259 = vpop.f32.mrb[0].mxu0
    %v260 = vadd.f32 0.0, %v259
    %v261 = vpop.f32.mrb[0].mxu0
    %262 = vmatprep.mubr.f32.mxu0 0.0
    %263 = vmatmul.mubr.f32.gmra.mrb[0].mxu0 %v141
    %v264 = vpop.f32.mrb[0].mxu0
    %v265 = vadd.f32 0.0, %v264
    %v266 = vpop.f32.mrb[0].mxu0
    %267 = vmatprep.mubr.f32.mxu0 0.0
    %268 = vmatmul.mubr.f32.gmra.mrb[0].mxu0 %v144
    %v269 = vpop.f32.mrb[0].mxu0
    %v270 = vadd.f32 0.0, %v269
    %v271 = vpop.f32.mrb[0].mxu0
    %272 = vmatprep.mubr.f32.mxu0 0.0
    %273 = vmatmul.mubr.f32.gmra.mrb[0].mxu0 %v147
    %v274 = vpop.f32.mrb[0].mxu0
    %v275 = vadd.f32 0.0, %v274
    %v276 = vpop.f32.mrb[0].mxu0
    %277 = vmatprep.mubr.f32.mxu0 0.0
    %278 = vmatmul.mubr.f32.gmra.mrb[0].mxu0 %v150
    %v279 = vpop.f32.mrb[0].mxu0
    %v280 = vadd.f32 0.0, %v279
    %v281 = vpop.f32.mrb[0].mxu0
    %282 = vmatprep.mubr.f32.mxu0 0.0
    %283 = vmatmul.mubr.f32.gmra.mrb[0].mxu0 %v153
    %v284 = vpop.f32.mrb[0].mxu0
    %v285 = vadd.f32 0.0, %v284
    %v286 = vpop.f32.mrb[0].mxu0
    %287 = vmatprep.mubr.f32.mxu0 0.0
    %288 = vmatmul.mubr.f32.gmra.mrb[0].mxu0 %v156
    %v289 = vpop.f32.mrb[0].mxu0
    %v290 = vadd.f32 0.0, %v289
    %v291 = vpop.f32.mrb[0].mxu0
    %292 = vmatprep.mubr.f32.mxu0 0.0
    %293 = vmatmul.mubr.f32.gmra.mrb[0].mxu0 %v159
    %v294 = vpop.f32.mrb[0].mxu0
    %v295 = vadd.f32 0.0, %v294
    %v296 = vpop.f32.mrb[0].mxu0
    %297 = vmatprep.mubr.f32.mxu0 0.0
    %298 = vmatmul.mubr.f32.gmra.mrb[0].mxu0 %v162
    %v299 = vpop.f32.mrb[0].mxu0
    %v300 = vadd.f32 0.0, %v299
    %v301 = vpop.f32.mrb[0].mxu0
    %302 = vmatprep.mubr.f32.mxu0 0.0
    %303 = vmatmul.mubr.f32.gmra.mrb[0].mxu0 %v165
    %v304 = vpop.f32.mrb[0].mxu0
    %v305 = vadd.f32 0.0, %v304
    %v306 = vpop.f32.mrb[0].mxu0
    %307 = vmatprep.mubr.f32.mxu0 0.0
    %308 = vmatmul.mubr.f32.gmra.mrb[0].mxu0 %v168
    %v309 = vpop.f32.mrb[0].mxu0
    %v310 = vadd.f32 0.0, %v309
    %v311 = vpop.f32.mrb[0].mxu0
    %312 = vmatprep.mubr.f32.mxu0 0.0
    %313 = vmatmul.mubr.f32.gmra.mrb[0].mxu0 %v171
    %v314 = vpop.f32.mrb[0].mxu0
    %v315 = vadd.f32 0.0, %v314
    %v316 = vpop.f32.mrb[0].mxu0
    %317 = vdwg.mxu0
    %p318 = scmp.eq.s32.totalorder 0, 0
    // Predicated region
    $region26: #{tpu_custom_call.1} parent=1 // pred_check
      %p319 = pneg %p318
    $region27: #{tpu_custom_call.1} parent=1 // pred_check_branch
      %321 = sbr.rel (%p319) target = $region29
    $region28: #{tpu_custom_call.1} parent=1 // pred_region
      %322 = vst [vmem:[#allocation2] sm:$0xff] %v240
      %323 = vst [vmem:[#allocation2 + $0x8] sm:$0xff] %v245
      %324 = vst [vmem:[#allocation2 + $0x10] sm:$0xff] %v250
      %325 = vst [vmem:[#allocation2 + $0x18] sm:$0xff] %v255
      %326 = vst [vmem:[#allocation2 + $0x20] sm:$0xff] %v260
      %327 = vst [vmem:[#allocation2 + $0x28] sm:$0xff] %v265
      %328 = vst [vmem:[#allocation2 + $0x30] sm:$0xff] %v270
      %329 = vst [vmem:[#allocation2 + $0x38] sm:$0xff] %v275
      %330 = vst [vmem:[#allocation2 + $0x40] sm:$0xff] %v280
      %331 = vst [vmem:[#allocation2 + $0x48] sm:$0xff] %v285
      %332 = vst [vmem:[#allocation2 + $0x50] sm:$0xff] %v290
      %333 = vst [vmem:[#allocation2 + $0x58] sm:$0xff] %v295
      %334 = vst [vmem:[#allocation2 + $0x60] sm:$0xff] %v300
      %335 = vst [vmem:[#allocation2 + $0x68] sm:$0xff] %v305
      %336 = vst [vmem:[#allocation2 + $0x70] sm:$0xff] %v310
      %337 = vst [vmem:[#allocation2 + $0x78] sm:$0xff] %v315
      %v338 = vld [vmem:[#allocation4] sm:$0x1]
      %v339 = vlaneseq
      %v340 = vshrl.u32 %v339, 7
      %v341 = vsub.s32 0, %v340
      %v342 = vrot.slane %v338, %v341
      %vm343 = vcmp.eq.s32.totalorder %v49, %v342
      %v344 = vsel %vm343, 1, 0
      %v345 = vcvt.s32.f32 %v344
      %346 = vst [vmem:[#allocation3] sm:$0xff] %v345
    $region29: #{tpu_custom_call.1} parent=1 // pred_fallthru
      _
    %p347 = scmp.gt.s32.totalorder 0, 0
    // Predicated region
    $region30: #{tpu_custom_call.1} parent=1 // pred_check
      %p348 = pneg %p347
    $region31: #{tpu_custom_call.1} parent=1 // pred_check_branch
      %350 = sbr.rel (%p348) target = $region33
    $region32: #{tpu_custom_call.1} parent=1 // pred_region
      %v351 = vld [vmem:[#allocation2] sm:$0xff]
      %v352 = vld [vmem:[#allocation2 + $0x8] sm:$0xff]
      %v353 = vld [vmem:[#allocation2 + $0x10] sm:$0xff]
      %v354 = vld [vmem:[#allocation2 + $0x18] sm:$0xff]
      %v355 = vld [vmem:[#allocation2 + $0x20] sm:$0xff]
      %v356 = vld [vmem:[#allocation2 + $0x28] sm:$0xff]
      %v357 = vld [vmem:[#allocation2 + $0x30] sm:$0xff]
      %v358 = vld [vmem:[#allocation2 + $0x38] sm:$0xff]
      %v359 = vld [vmem:[#allocation2 + $0x40] sm:$0xff]
      %v360 = vld [vmem:[#allocation2 + $0x48] sm:$0xff]
      %v361 = vld [vmem:[#allocation2 + $0x50] sm:$0xff]
      %v362 = vld [vmem:[#allocation2 + $0x58] sm:$0xff]
      %v363 = vld [vmem:[#allocation2 + $0x60] sm:$0xff]
      %v364 = vld [vmem:[#allocation2 + $0x68] sm:$0xff]
      %v365 = vld [vmem:[#allocation2 + $0x70] sm:$0xff]
      %v366 = vld [vmem:[#allocation2 + $0x78] sm:$0xff]
      %v367 = vadd.f32 %v351, %v240
      %v368 = vadd.f32 %v352, %v245
      %v369 = vadd.f32 %v353, %v250
      %v370 = vadd.f32 %v354, %v255
      %v371 = vadd.f32 %v355, %v260
      %v372 = vadd.f32 %v356, %v265
      %v373 = vadd.f32 %v357, %v270
      %v374 = vadd.f32 %v358, %v275
      %v375 = vadd.f32 %v359, %v280
      %v376 = vadd.f32 %v360, %v285
      %v377 = vadd.f32 %v361, %v290
      %v378 = vadd.f32 %v362, %v295
      %v379 = vadd.f32 %v363, %v300
      %v380 = vadd.f32 %v364, %v305
      %v381 = vadd.f32 %v365, %v310
      %v382 = vadd.f32 %v366, %v315
      %383 = vst [vmem:[#allocation2] sm:$0xff] %v367
      %384 = vst [vmem:[#allocation2 + $0x8] sm:$0xff] %v368
      %385 = vst [vmem:[#allocation2 + $0x10] sm:$0xff] %v369
      %386 = vst [vmem:[#allocation2 + $0x18] sm:$0xff] %v370
      %387 = vst [vmem:[#allocation2 + $0x20] sm:$0xff] %v371
      %388 = vst [vmem:[#allocation2 + $0x28] sm:$0xff] %v372
      %389 = vst [vmem:[#allocation2 + $0x30] sm:$0xff] %v373
      %390 = vst [vmem:[#allocation2 + $0x38] sm:$0xff] %v374
      %391 = vst [vmem:[#allocation2 + $0x40] sm:$0xff] %v375
      %392 = vst [vmem:[#allocation2 + $0x48] sm:$0xff] %v376
      %393 = vst [vmem:[#allocation2 + $0x50] sm:$0xff] %v377
      %394 = vst [vmem:[#allocation2 + $0x58] sm:$0xff] %v378
      %395 = vst [vmem:[#allocation2 + $0x60] sm:$0xff] %v379
      %396 = vst [vmem:[#allocation2 + $0x68] sm:$0xff] %v380
      %397 = vst [vmem:[#allocation2 + $0x70] sm:$0xff] %v381
      %398 = vst [vmem:[#allocation2 + $0x78] sm:$0xff] %v382
    $region33: #{tpu_custom_call.1} parent=1 // pred_fallthru
      _
    // Predicated region
    $region34: #{tpu_custom_call.1} parent=1 // pred_check
      %p399 = pneg %p318
    $region35: #{tpu_custom_call.1} parent=1 // pred_check_branch
      %401 = sbr.rel (%p399) target = $region37
    $region36: #{tpu_custom_call.1} parent=1 // pred_region
      %v402 = vld [vmem:[#allocation3] sm:$0xff]
      %v403 = vld [vmem:[#allocation2] sm:$0xff]
      %v404 = vld [vmem:[#allocation2 + $0x8] sm:$0xff]
      %v405 = vld [vmem:[#allocation2 + $0x10] sm:$0xff]
      %v406 = vld [vmem:[#allocation2 + $0x18] sm:$0xff]
      %v407 = vld [vmem:[#allocation2 + $0x20] sm:$0xff]
      %v408 = vld [vmem:[#allocation2 + $0x28] sm:$0xff]
      %v409 = vld [vmem:[#allocation2 + $0x30] sm:$0xff]
      %v410 = vld [vmem:[#allocation2 + $0x38] sm:$0xff]
      %v411 = vld [vmem:[#allocation2 + $0x40] sm:$0xff]
      %v412 = vld [vmem:[#allocation2 + $0x48] sm:$0xff]
      %v413 = vld [vmem:[#allocation2 + $0x50] sm:$0xff]
      %v414 = vld [vmem:[#allocation2 + $0x58] sm:$0xff]
      %v415 = vld [vmem:[#allocation2 + $0x60] sm:$0xff]
      %v416 = vld [vmem:[#allocation2 + $0x68] sm:$0xff]
      %v417 = vld [vmem:[#allocation2 + $0x70] sm:$0xff]
      %v418 = vld [vmem:[#allocation2 + $0x78] sm:$0xff]
      %419 = vmatprep.subr.mxu0 0.0
      %420 = vmatpush1.msra.mxu0 %v403
      %421 = vmatprep.subr.mxu0 0.0
      %422 = vmatpush1.msra.mxu0 %v404
      %423 = vmatprep.subr.mxu0 0.0
      %424 = vmatpush1.msra.mxu0 %v405
      %425 = vmatprep.subr.mxu0 0.0
      %426 = vmatpush1.msra.mxu0 %v406
      %427 = vmatprep.subr.mxu0 0.0
      %428 = vmatpush1.msra.mxu0 %v407
      %429 = vmatprep.subr.mxu0 0.0
      %430 = vmatpush1.msra.mxu0 %v408
      %431 = vmatprep.subr.mxu0 0.0
      %432 = vmatpush1.msra.mxu0 %v409
      %433 = vmatprep.subr.mxu0 0.0
      %434 = vmatpush1.msra.mxu0 %v410
      %435 = vmatprep.subr.mxu0 0.0
      %436 = vmatpush1.msra.mxu0 %v411
      %437 = vmatprep.subr.mxu0 0.0
      %438 = vmatpush1.msra.mxu0 %v412
      %439 = vmatprep.subr.mxu0 0.0
      %440 = vmatpush1.msra.mxu0 %v413
      %441 = vmatprep.subr.mxu0 0.0
      %442 = vmatpush1.msra.mxu0 %v414
      %443 = vmatprep.subr.mxu0 0.0
      %444 = vmatpush1.msra.mxu0 %v415
      %445 = vmatprep.subr.mxu0 0.0
      %446 = vmatpush1.msra.mxu0 %v416
      %447 = vmatprep.subr.mxu0 0.0
      %448 = vmatpush1.msra.mxu0 %v417
      %449 = vmatprep.subr.mxu0 0.0
      %450 = vmatpush1.msra.mxu0 %v418
      %451 = vmatprep.subr.mxu0 0.0
      %452 = vmatpush1.msra.mxu0 0.0
      %453 = vmatprep.subr.mxu0 0.0
      %454 = vmatpush1.msra.mxu0 0.0
      %455 = vmatprep.subr.mxu0 0.0
      %456 = vmatpush1.msra.mxu0 0.0
      %457 = vmatprep.subr.mxu0 0.0
      %458 = vmatpush1.msra.mxu0 0.0
      %459 = vmatprep.subr.mxu0 0.0
      %460 = vmatpush1.msra.mxu0 0.0
      %461 = vmatprep.subr.mxu0 0.0
      %462 = vmatpush1.msra.mxu0 0.0
      %463 = vmatprep.subr.mxu0 0.0
      %464 = vmatpush1.msra.mxu0 0.0
      %465 = vmatprep.subr.mxu0 0.0
      %466 = vmatpush1.msra.mxu0 0.0
      %467 = vmatprep.subr.mxu0 0.0
      %468 = vmatpush1.msra.mxu0 0.0
      %469 = vmatprep.subr.mxu0 0.0
      %470 = vmatpush1.msra.mxu0 0.0
      %471 = vmatprep.subr.mxu0 0.0
      %472 = vmatpush1.msra.mxu0 0.0
      %473 = vmatprep.subr.mxu0 0.0
      %474 = vmatpush1.msra.mxu0 0.0
      %475 = vmatprep.subr.mxu0 0.0
      %476 = vmatpush1.msra.mxu0 0.0
      %477 = vmatprep.subr.mxu0 0.0
      %478 = vmatpush1.msra.mxu0 0.0
      %479 = vmatprep.subr.mxu0 0.0
      %480 = vmatpush1.msra.mxu0 0.0
      %481 = vmatprep.subr.mxu0 0.0
      %482 = vmatpush1.msra.mxu0 0.0
      %483 = vmatprep.mubr.f32.mxu0 0.0
      %484 = vmatmul.mubr.f32.gmra.mrb[0].mxu0 %v402
      %v485 = vpop.f32.mrb[0].mxu0
      %v486 = vadd.f32 0.0, %v485
      %v487 = vpop.f32.mrb[0].mxu0
      %488 = vdwg.mxu0
      %489 = vst [vmem:[#allocation9] sm:$0xff] %v486
    $region37: #{tpu_custom_call.1} parent=1 // pred_fallthru
      _
    // Predicated region
    $region38: #{tpu_custom_call.1} parent=1 // pred_check
      _
    $region39: #{tpu_custom_call.1} parent=1 // pred_check_branch
      %491 = sbr.rel (0) target = $region41
    $region40: #{tpu_custom_call.1} parent=1 // pred_region
      %s493 = ssub.s32 128, 128
      %494 = vsyncadd [#allocation6], %s493
      %s496 = sshll.u32 [#allocation9], 4
      %s497 = int_to_ptr.vmem [resolvable:$true] %s496
      %499 = dma.vmem_to_hbm [thread:$0]  %s497, 128, %s4, [#allocation6]
    $region41: #{tpu_custom_call.1} parent=1 // pred_fallthru
      _
    // Predicated region
    $region42: #{tpu_custom_call.1} parent=1 // pred_check
      _
    $region43: #{tpu_custom_call.1} parent=1 // pred_check_branch
      %501 = sbr.rel (0) target = $region45
    $region44: #{tpu_custom_call.1} parent=1 // pred_region
      %502 = dma.done [#allocation6], 128
    $region45: #{tpu_custom_call.1} parent=1 // pred_fallthru
      _
    %503 = vsyncpa [#allocation5], 1
    %504 = vsyncpa [#allocation8], 1
    %505 = vsyncpa [#allocation6], 1

</llo_original>
